<compile_context>
chip_gen: v7x
topology: tpu7x:2x2x1
jax: 0.10.0
libtpu: 0.0.40
codegen_flags: <defaults>
</compile_context>

<pallas_src>
import functools

import jax
import jax.numpy as jnp
from jax.experimental import pallas as pl
from jax.experimental.pallas import tpu as pltpu


def _round_down_to_8(x: int) -> int:
    return max(8, (x // 8) * 8)


# --------------------------------------------------------------------------- #
# Kernel body
# --------------------------------------------------------------------------- #
def _mlp_kernel(x_ref, w1_ref, w2_ref, o_ref, *, compute_dtype, approximate_gelu):
    # x_ref: (tm, H)   w1_ref: (H, I)   w2_ref: (I, H)   o_ref: (tm, H)
    x = x_ref[...]
    if x.dtype != compute_dtype:
        x = x.astype(compute_dtype)          # in-kernel cast; hidden under MXU time
    h = jnp.dot(x, w1_ref[...], preferred_element_type=jnp.float32)
    # f32 GELU: safe on all generations (v5e has no bf16 VPU/EUP); MXU-bound
    # kernel -> the tanh/erf elementwise work is filler.
    # approximate=True  -> tanh GELU (EUP path, guaranteed Mosaic lowering)
    # approximate=False -> exact erf GELU (matches PyTorch nn.GELU default)
    h = jax.nn.gelu(h, approximate=approximate_gelu)
    y = jnp.dot(h.astype(compute_dtype), w2_ref[...],
                preferred_element_type=jnp.float32)
    o_ref[...] = y.astype(o_ref.dtype)


# --------------------------------------------------------------------------- #
# VMEM budgeting (generation-aware)
# --------------------------------------------------------------------------- #
def _vmem_capacity_bytes() -> int:
    # Hardware query only; never used to hide kernel errors.  Falls back to the
    # smallest per-core VMEM (v7x, 64 MiB) so tile choices are always safe.
    try:
        cap = getattr(pltpu.get_tpu_info(), "vmem_capacity_bytes", None)
        if cap:
            return int(cap)
    except Exception:
        pass
    return 64 << 20


def _vmem_need_bytes(tm, H, I, x_itemsize, out_itemsize, c_itemsize, w_bufs):
    return (2 * tm * H * x_itemsize            # x tile (double-buffered)
            + 2 * tm * H * out_itemsize        # out tile (double-buffered)
            + w_bufs * 2 * H * I * c_itemsize  # resident W1 + W2
            + tm * I * 4 + tm * H * 4          # f32 intermediate + accumulator
            + tm * I * c_itemsize)             # bf16 copy of the intermediate


def _supports_buffered_blockspec() -> bool:
    # Capability probe: construct (not lower) a Buffered BlockSpec.
    try:
        pl.BlockSpec((8, 128), lambda i: (0, 0), pipeline_mode=pl.Buffered(1))
        return True
    except (AttributeError, TypeError):
        return False


# --------------------------------------------------------------------------- #
# pallas_call builder
# --------------------------------------------------------------------------- #
@functools.lru_cache(maxsize=None)
def _build_mlp_call(M, H, I, tm, x_dtype, compute_dtype, out_dtype,
                    approximate_gelu, single_buffer_weights, vmem_limit):
    x_dtype = jnp.dtype(x_dtype)
    compute_dtype = jnp.dtype(compute_dtype)
    out_dtype = jnp.dtype(out_dtype)

    weight_kwargs = ({"pipeline_mode": pl.Buffered(1)}
                     if single_buffer_weights else {})

    cost = pl.CostEstimate(
        flops=4 * M * H * I,                       # two matmuls, 2*M*H*I each
        transcendentals=M * I,                     # one GELU per intermediate elem
        bytes_accessed=(M * H * x_dtype.itemsize   # read x
                        + M * H * out_dtype.itemsize       # write y
                        + 2 * H * I * compute_dtype.itemsize),  # W1 + W2
    )

    return pl.pallas_call(
        functools.partial(_mlp_kernel, compute_dtype=compute_dtype,
                          approximate_gelu=approximate_gelu),
        out_shape=jax.ShapeDtypeStruct((M, H), out_dtype),
        grid_spec=pltpu.PrefetchScalarGridSpec(
            num_scalar_prefetch=0,
            grid=(pl.cdiv(M, tm),),                 # ragged last block handled by Pallas
            in_specs=[
                pl.BlockSpec((tm, H), lambda i: (i, 0)),                 # x rows
                pl.BlockSpec((H, I), lambda i: (0, 0), **weight_kwargs),  # W1
                pl.BlockSpec((I, H), lambda i: (0, 0), **weight_kwargs),  # W2
            ],
            out_specs=pl.BlockSpec((tm, H), lambda i: (i, 0)),
        ),
        compiler_params=pltpu.CompilerParams(
            dimension_semantics=("parallel",),       # megacore-shard token tiles
            vmem_limit_bytes=vmem_limit,
        ),
        cost_estimate=cost,
    )


# --------------------------------------------------------------------------- #
# Public wrapper
# --------------------------------------------------------------------------- #
def bert_mlp(hidden_states, w1, w2, *, tm=512,
             compute_dtype=jnp.bfloat16, approximate_gelu=True):
    """Fused BertMLP forward: gelu(x @ W1) @ W2.

    hidden_states: (B, S, H);  w1: (H, I);  w2: (I, H)  ->  (B, S, H).
    Weights should ideally already be stored in `compute_dtype` (bf16); if not
    they are cast here (small matrices -- the large activation tensor is never
    touched outside the kernel).
    """
    B, S, H = hidden_states.shape
    Hw, I = w1.shape
    assert Hw == H and w2.shape == (I, H)
    compute_dtype = jnp.dtype(compute_dtype)
    out_dtype = jnp.dtype(hidden_states.dtype)
    x_dtype = out_dtype

    M = B * S
    x2d = hidden_states.reshape(M, H)               # view; no pad, no cast

    w1c = w1 if w1.dtype == compute_dtype else w1.astype(compute_dtype)
    w2c = w2 if w2.dtype == compute_dtype else w2.astype(compute_dtype)

    # ---- choose the token tile from the actual per-core VMEM budget ----
    budget = int(_vmem_capacity_bytes() * 0.85)     # headroom for Mosaic scratch
    tm_eff = min(tm, M)
    if M >= 8:
        tm_eff = _round_down_to_8(tm_eff)
    # Size conservatively assuming double-buffered weights so the non-Buffered
    # fallback path also fits.
    while (tm_eff > 8 and
           _vmem_need_bytes(tm_eff, H, I, x_dtype.itemsize, out_dtype.itemsize,
                            compute_dtype.itemsize, w_bufs=2) > budget):
        tm_eff = _round_down_to_8(tm_eff // 2)
    # TODO(synk): if resident W1+W2 alone exceed the VMEM budget (very large
    # intermediate sizes on v7x), add an inner I-tiling path with a (tm, H)
    # f32 accumulator (pl.when init/finalize) instead of fully-resident weights.
    need = _vmem_need_bytes(tm_eff, H, I, x_dtype.itemsize, out_dtype.itemsize,
                            compute_dtype.itemsize, w_bufs=2)
    vmem_limit = int(min(budget, max(need * 3 // 2 + (4 << 20), 32 << 20)))

    build = functools.partial(
        _build_mlp_call, M, H, I, tm_eff, x_dtype, compute_dtype, out_dtype,
        approximate_gelu)

    if _supports_buffered_blockspec():
        try:
            return build(True, vmem_limit)(x2d, w1c, w2c).reshape(B, S, H)
        except (TypeError, ValueError, pltpu.LoweringException):
            # Narrow fallback: only pipeline_mode rejection; genuine kernel /
            # runtime bugs propagate to the caller.
            pass
    return build(False, vmem_limit)(x2d, w1c, w2c).reshape(B, S, H)


# --------------------------------------------------------------------------- #
# Pure-JAX reference (same bf16 MXU inputs / f32 accumulation as the kernel)
# --------------------------------------------------------------------------- #
def _reference_mlp(hidden_states, w1, w2, *, compute_dtype=jnp.bfloat16,
                   approximate_gelu=True):
    x = hidden_states.astype(compute_dtype)
    h = jnp.dot(x, w1.astype(compute_dtype), preferred_element_type=jnp.float32)
    h = jax.nn.gelu(h, approximate=approximate_gelu)
    y = jnp.dot(h.astype(compute_dtype), w2.astype(compute_dtype),
                preferred_element_type=jnp.float32)
    return y.astype(hidden_states.dtype)


if __name__ == "__main__":
    # Small BertConfig-like shapes: hidden_size=32, intermediate_size=128.
    # NOTE: deployment shapes (H=768/1024, I=3072/4096) are already lane-aligned
    # (multiples of 128); this toy H=32 config exercises masked, lane-sparse
    # stores and a K=32 matmul -- do not tune performance against it.
    batch, seq, hidden, intermediate = 2, 8, 32, 128

    key = jax.random.PRNGKey(0)
    kx, k1, k2 = jax.random.split(key, 3)

    x = jax.random.normal(kx, (batch, seq, hidden), dtype=jnp.float32)
    # Kaiming-uniform-ish init (bound = 1/sqrt(fan_in)), stored transposed
    # relative to torch nn.Linear's (out, in) so the kernel computes x @ W.
    w1 = jax.random.uniform(k1, (hidden, intermediate), dtype=jnp.float32,
                            minval=-1.0, maxval=1.0) / jnp.sqrt(hidden)
    w2 = jax.random.uniform(k2, (intermediate, hidden), dtype=jnp.float32,
                            minval=-1.0, maxval=1.0) / jnp.sqrt(intermediate)

    # Pre-cast the (small) weights to the MXU compute dtype once, outside the
    # per-call hot path, exactly as a deployment checkpoint would store them.
    w1_bf16 = w1.astype(jnp.bfloat16)
    w2_bf16 = w2.astype(jnp.bfloat16)

    out = bert_mlp(x, w1_bf16, w2_bf16)
    out = jax.block_until_ready(out)

    ref = _reference_mlp(x, w1, w2)
    assert out.shape == (batch, seq, hidden)
    assert out.dtype == x.dtype
    max_err = float(jnp.max(jnp.abs(out - ref)))
    assert jnp.allclose(out, ref, atol=1e-2, rtol=1e-2), (
        f"mismatch vs JAX reference (max abs err {max_err})")

    print("KERNEL_OK")
</pallas_src>

<mosaic_0001>
module attributes {stable_mosaic.version = 11 : i64} {
  func.func @_mlp_kernel(%arg0: i32, %arg1: memref<16x32xf32, #tpu.memory_space<vmem>>, %arg2: memref<32x128xbf16, #tpu.memory_space<vmem>>, %arg3: memref<128x32xbf16, #tpu.memory_space<vmem>>, %arg4: memref<16x32xf32, #tpu.memory_space<vmem>>) attributes {dimension_semantics = [#tpu.dimension_semantics<parallel>], iteration_bounds = array<i64: 1>, scalar_prefetch = 0 : i64, scratch_operands = 0 : i64, tpu.core_type = #tpu.core_type<tc>, window_params = [{transform_indices = @transform_0, window_bounds = array<i64: 16, 32>}, {pipeline_mode = #tpu.pipeline_mode<synchronous>, transform_indices = @transform_1, window_bounds = array<i64: 32, 128>}, {pipeline_mode = #tpu.pipeline_mode<synchronous>, transform_indices = @transform_2, window_bounds = array<i64: 128, 32>}, {transform_indices = @transform_3, window_bounds = array<i64: 16, 32>}]} {
    %c0 = arith.constant 0 : index
    %c0_0 = arith.constant 0 : index
    %0 = vector.load %arg1[%c0, %c0_0] : memref<16x32xf32, #tpu.memory_space<vmem>>, vector<16x32xf32>
    %1 = arith.truncf %0 : vector<16x32xf32> to vector<16x32xbf16>
    %c0_1 = arith.constant 0 : index
    %c0_2 = arith.constant 0 : index
    %2 = vector.load %arg2[%c0_1, %c0_2] : memref<32x128xbf16, #tpu.memory_space<vmem>>, vector<32x128xbf16>
    %cst = arith.constant dense<0.000000e+00> : vector<16x128xf32>
    %3 = tpu.matmul %1, %2, %cst {dimension_numbers = #tpu.dot_dimension_numbers<[1], [0], [0], [1], [0, 0, 1, 1], [], []>} : vector<16x32xbf16>, vector<32x128xbf16>, vector<16x128xf32> -> vector<16x128xf32>
    %4 = arith.mulf %3, %3 : vector<16x128xf32>
    %5 = arith.mulf %3, %4 : vector<16x128xf32>
    %cst_3 = arith.constant 4.471500e-02 : f32
    %6 = vector.broadcast %cst_3 : f32 to vector<16x128xf32>
    %7 = arith.mulf %6, %5 : vector<16x128xf32>
    %8 = arith.addf %3, %7 : vector<16x128xf32>
    %cst_4 = arith.constant 0.797884583 : f32
    %9 = vector.broadcast %cst_4 : f32 to vector<16x128xf32>
    %10 = arith.mulf %9, %8 : vector<16x128xf32>
    %11 = math.tanh %10 : vector<16x128xf32>
    %cst_5 = arith.constant 1.000000e+00 : f32
    %12 = vector.broadcast %cst_5 : f32 to vector<16x128xf32>
    %13 = arith.addf %12, %11 : vector<16x128xf32>
    %cst_6 = arith.constant 5.000000e-01 : f32
    %14 = vector.broadcast %cst_6 : f32 to vector<16x128xf32>
    %15 = arith.mulf %14, %13 : vector<16x128xf32>
    %16 = arith.mulf %3, %15 : vector<16x128xf32>
    %17 = arith.truncf %16 : vector<16x128xf32> to vector<16x128xbf16>
    %c0_7 = arith.constant 0 : index
    %c0_8 = arith.constant 0 : index
    %18 = vector.load %arg3[%c0_7, %c0_8] : memref<128x32xbf16, #tpu.memory_space<vmem>>, vector<128x32xbf16>
    %cst_9 = arith.constant dense<0.000000e+00> : vector<16x32xf32>
    %19 = tpu.matmul %17, %18, %cst_9 {dimension_numbers = #tpu.dot_dimension_numbers<[1], [0], [0], [1], [0, 0, 1, 1], [], []>} : vector<16x128xbf16>, vector<128x32xbf16>, vector<16x32xf32> -> vector<16x32xf32>
    %c0_10 = arith.constant 0 : index
    %c0_11 = arith.constant 0 : index
    %20 = vector.load %arg4[%c0_10, %c0_11] : memref<16x32xf32, #tpu.memory_space<vmem>>, vector<16x32xf32>
    tpu.vector_store %arg4[%c0_10, %c0_11], %19 {strides = array<i32>} : memref<16x32xf32, #tpu.memory_space<vmem>>, vector<16x32xf32>,
    return
  }
  func.func @transform_0(%arg0: i32) -> (i32, i32) {
    %c0_i32 = arith.constant 0 : i32
    %c0_i32_0 = arith.constant 0 : i32
    return %arg0, %c0_i32 : i32, i32
  }
  func.func @transform_1(%arg0: i32) -> (i32, i32) {
    %c0_i32 = arith.constant 0 : i32
    %c0_i32_0 = arith.constant 0 : i32
    %c0_i32_1 = arith.constant 0 : i32
    return %c0_i32, %c0_i32_0 : i32, i32
  }
  func.func @transform_2(%arg0: i32) -> (i32, i32) {
    %c0_i32 = arith.constant 0 : i32
    %c0_i32_0 = arith.constant 0 : i32
    %c0_i32_1 = arith.constant 0 : i32
    return %c0_i32, %c0_i32_0 : i32, i32
  }
  func.func @transform_3(%arg0: i32) -> (i32, i32) {
    %c0_i32 = arith.constant 0 : i32
    %c0_i32_0 = arith.constant 0 : i32
    return %arg0, %c0_i32 : i32, i32
  }
}

</mosaic_0001>

<llo_original>
// kernel: tpu_custom_call.1
$region0: #{tpu_custom_call.1}
  #allocation0 [shape = 'u32[]', space=smem, size = 0x4, offset = 0x4, fixed_abs, tag = 'smem constant byte address 0x4 - core index']
  #allocation1 [shape = 'u32[144,128]{1,0:T(1,128)}', space=vmem, size = 0x12000, scoped, tag = 'internal scratch']
  %s0 = inlined_call_operand.vmem [shape: f32[16,32], index: 0, kind: input, shape index: {}]
  %s1 = inlined_call_operand.vmem [shape: bf16[32,128], index: 1, kind: input, shape index: {}]
  %s2 = inlined_call_operand.vmem [shape: bf16[128,32], index: 2, kind: input, shape index: {}]
  %s3 = inlined_call_operand.hbm [shape: f32[16,32], index: 3, kind: output, shape index: {}]
  %s4 = sld [smem:[#allocation0]]
  $region22: #{tpu_custom_call.1} parent=0
    _
  %s6 = ssub.s32 1, %s4
  %s7 = scalar_select 0, %s6, %s4
  $region1: #{tpu_custom_call.1} parent=0
    #allocation2 [shape = 'u8[8192]{0}', space=vmem, size = 0x2000, scoped, tag = 'output window, operand 0, single buffered']
    #allocation3 [shape = 's32[1]{0}', space=sflag, size = 0x4, scoped, tag = 'scoped memory for tpu_custom_call.1']
    %8 = vsyncpa [#allocation3], 0
    // Predicated region
    $region2: #{tpu_custom_call.1} parent=1 // pred_check
      _
    $region3: #{tpu_custom_call.1} parent=1 // pred_check_branch
      %10 = sbr.rel (0) target = $region5
    $region4: #{tpu_custom_call.1} parent=1 // pred_region
      _
    $region5: #{tpu_custom_call.1} parent=1 // pred_fallthru
      _
    // Predicated region
    $region6: #{tpu_custom_call.1} parent=1 // pred_check
      _
    $region7: #{tpu_custom_call.1} parent=1 // pred_check_branch
      %12 = sbr.rel (0) target = $region9
    $region8: #{tpu_custom_call.1} parent=1 // pred_region
      _
    $region9: #{tpu_custom_call.1} parent=1 // pred_fallthru
      _
    // Predicated region
    $region10: #{tpu_custom_call.1} parent=1 // pred_check
      _
    $region11: #{tpu_custom_call.1} parent=1 // pred_check_branch
      %14 = sbr.rel (0) target = $region13
    $region12: #{tpu_custom_call.1} parent=1 // pred_region
      _
    $region13: #{tpu_custom_call.1} parent=1 // pred_fallthru
      _
    %v16 = vld [vmem:[%s0] sm:$0xff]
    %v17 = vld [vmem:[%s0 + $0x8] sm:$0xff]
    %v18 = vpack.c.bf16 %v17, %v16
    %v19 = vld [vmem:[%s1] sm:$0xf]
    %v20 = vld [vmem:[%s1 + $0x4] sm:$0xf]
    %v21 = vld [vmem:[%s1 + $0x8] sm:$0xf]
    %v22 = vld [vmem:[%s1 + $0xc] sm:$0xf]
    %v27 = vunpack.c.l.b16 %v19
    %v28 = vunpack.c.l.b16 %v20
    %v29 = vunpack.c.l.b16 %v21
    %v30 = vunpack.c.l.b16 %v22
    %v31 = vpack.c.b16 %v28, %v27
    %v32 = vpack.c.b16 %v30, %v29
    %vm35 = vcmask 261120
    %v37 = vsel %vm35, %v18, 0
    %39 = vmatprep.subr.bf16.mxu0 0
    %40 = vmatpush1.bf16.msra.mxu0 %v31
    %41 = vmatprep.subr.bf16.mxu0 0
    %42 = vmatpush1.bf16.msra.mxu0 %v32
    %43 = vmatprep.subr.bf16.mxu0 0
    %44 = vmatpush1.bf16.msra.mxu0 0
    %45 = vmatprep.subr.bf16.mxu0 0
    %46 = vmatpush1.bf16.msra.mxu0 0
    %47 = vmatprep.subr.bf16.mxu0 0
    %48 = vmatpush1.bf16.msra.mxu0 0
    %49 = vmatprep.subr.bf16.mxu0 0
    %50 = vmatpush1.bf16.msra.mxu0 0
    %51 = vmatprep.subr.bf16.mxu0 0
    %52 = vmatpush1.bf16.msra.mxu0 0
    %53 = vmatprep.subr.bf16.mxu0 0
    %54 = vmatpush1.bf16.msra.mxu0 0
    %55 = vmatprep.subr.bf16.mxu0 0
    %56 = vmatpush1.bf16.msra.mxu0 0
    %57 = vmatprep.subr.bf16.mxu0 0
    %58 = vmatpush1.bf16.msra.mxu0 0
    %59 = vmatprep.subr.bf16.mxu0 0
    %60 = vmatpush1.bf16.msra.mxu0 0
    %61 = vmatprep.subr.bf16.mxu0 0
    %62 = vmatpush1.bf16.msra.mxu0 0
    %63 = vmatprep.subr.bf16.mxu0 0
    %64 = vmatpush1.bf16.msra.mxu0 0
    %65 = vmatprep.subr.bf16.mxu0 0
    %66 = vmatpush1.bf16.msra.mxu0 0
    %67 = vmatprep.subr.bf16.mxu0 0
    %68 = vmatpush1.bf16.msra.mxu0 0
    %69 = vmatprep.subr.bf16.mxu0 0
    %70 = vmatpush1.bf16.msra.mxu0 0
    %71 = vmatprep.mubr.bf16.mxu0 0
    %72 = vmatmul.mubr.bf16.gmra.mrb[0].mxu0 %v37
    %v73 = vpop.f32.mrb[0].mxu0
    %v74 = vadd.f32 0.0, %v73
    %v75 = vpop.f32.mrb[0].mxu0
    %v76 = vpop.f32.mrb[0].mxu0
    %v77 = vadd.f32 0.0, %v76
    %v78 = vpop.f32.mrb[0].mxu0
    %79 = vdwg.mxu0
    %v80 = vmul.f32 %v74, %v74
    %v81 = vmul.f32 %v77, %v77
    %v82 = vmul.f32 %v74, %v80
    %v83 = vmul.f32 %v77, %v81
    %v84 = vmul.f32 %v82, 0.044715
    %v85 = vmul.f32 %v83, 0.044715
    %v86 = vadd.f32 %v74, %v84
    %v87 = vadd.f32 %v77, %v85
    %v88 = vmul.f32 %v86, 0.7978846
    %v89 = vmul.f32 %v87, 0.7978846
    %v90 = vtanh.pop %v88
    %v91 = vtanh.pop %v89
    %v92 = vadd.f32 %v90, 1.0
    %v93 = vadd.f32 %v91, 1.0
    %v94 = vmul.f32 %v92, 0.5
    %v95 = vmul.f32 %v93, 0.5
    %v96 = vmul.f32 %v74, %v94
    %v97 = vmul.f32 %v77, %v95
    %v98 = vpack.c.bf16 %v97, %v96
    %v99 = vld [vmem:[%s2] sm:$0xf]
    %v100 = vld [vmem:[%s2 + $0x4] sm:$0xf]
    %v101 = vld [vmem:[%s2 + $0x8] sm:$0xf]
    %v102 = vld [vmem:[%s2 + $0xc] sm:$0xf]
    %v103 = vld [vmem:[%s2 + $0x10] sm:$0xf]
    %v104 = vld [vmem:[%s2 + $0x14] sm:$0xf]
    %v105 = vld [vmem:[%s2 + $0x18] sm:$0xf]
    %v106 = vld [vmem:[%s2 + $0x1c] sm:$0xf]
    %v107 = vld [vmem:[%s2 + $0x20] sm:$0xf]
    %v108 = vld [vmem:[%s2 + $0x24] sm:$0xf]
    %v109 = vld [vmem:[%s2 + $0x28] sm:$0xf]
    %v110 = vld [vmem:[%s2 + $0x2c] sm:$0xf]
    %v111 = vld [vmem:[%s2 + $0x30] sm:$0xf]
    %v112 = vld [vmem:[%s2 + $0x34] sm:$0xf]
    %v113 = vld [vmem:[%s2 + $0x38] sm:$0xf]
    %v114 = vld [vmem:[%s2 + $0x3c] sm:$0xf]
    %v131 = vunpack.c.l.b16 %v99
    %v132 = vunpack.c.l.b16 %v100
    %v133 = vunpack.c.l.b16 %v101
    %v134 = vunpack.c.l.b16 %v102
    %v135 = vunpack.c.l.b16 %v103
    %v136 = vunpack.c.l.b16 %v104
    %v137 = vunpack.c.l.b16 %v105
    %v138 = vunpack.c.l.b16 %v106
    %v139 = vunpack.c.l.b16 %v107
    %v140 = vunpack.c.l.b16 %v108
    %v141 = vunpack.c.l.b16 %v109
    %v142 = vunpack.c.l.b16 %v110
    %v143 = vunpack.c.l.b16 %v111
    %v144 = vunpack.c.l.b16 %v112
    %v145 = vunpack.c.l.b16 %v113
    %v146 = vunpack.c.l.b16 %v114
    %v147 = vpack.c.b16 %v132, %v131
    %v148 = vpack.c.b16 %v134, %v133
    %v149 = vpack.c.b16 %v136, %v135
    %v150 = vpack.c.b16 %v138, %v137
    %v151 = vpack.c.b16 %v140, %v139
    %v152 = vpack.c.b16 %v142, %v141
    %v153 = vpack.c.b16 %v144, %v143
    %v154 = vpack.c.b16 %v146, %v145
    %163 = vmatprep.subr.bf16.mxu0 0
    %164 = vmatpush1.bf16.msra.mxu0 %v147
    %165 = vmatprep.subr.bf16.mxu0 0
    %166 = vmatpush1.bf16.msra.mxu0 %v148
    %167 = vmatprep.subr.bf16.mxu0 0
    %168 = vmatpush1.bf16.msra.mxu0 %v149
    %169 = vmatprep.subr.bf16.mxu0 0
    %170 = vmatpush1.bf16.msra.mxu0 %v150
    %171 = vmatprep.subr.bf16.mxu0 0
    %172 = vmatpush1.bf16.msra.mxu0 %v151
    %173 = vmatprep.subr.bf16.mxu0 0
    %174 = vmatpush1.bf16.msra.mxu0 %v152
    %175 = vmatprep.subr.bf16.mxu0 0
    %176 = vmatpush1.bf16.msra.mxu0 %v153
    %177 = vmatprep.subr.bf16.mxu0 0
    %178 = vmatpush1.bf16.msra.mxu0 %v154
    %179 = vmatprep.subr.bf16.mxu0 0
    %180 = vmatpush1.bf16.msra.mxu0 0
    %181 = vmatprep.subr.bf16.mxu0 0
    %182 = vmatpush1.bf16.msra.mxu0 0
    %183 = vmatprep.subr.bf16.mxu0 0
    %184 = vmatpush1.bf16.msra.mxu0 0
    %185 = vmatprep.subr.bf16.mxu0 0
    %186 = vmatpush1.bf16.msra.mxu0 0
    %187 = vmatprep.subr.bf16.mxu0 0
    %188 = vmatpush1.bf16.msra.mxu0 0
    %189 = vmatprep.subr.bf16.mxu0 0
    %190 = vmatpush1.bf16.msra.mxu0 0
    %191 = vmatprep.subr.bf16.mxu0 0
    %192 = vmatpush1.bf16.msra.mxu0 0
    %193 = vmatprep.subr.bf16.mxu0 0
    %194 = vmatpush1.bf16.msra.mxu0 0
    %195 = vmatprep.mubr.bf16.mxu0 0
    %196 = vmatmul.mubr.bf16.gmra.mrb[0].mxu0 %v98
    %v197 = vpop.f32.mrb[0].mxu0
    %v198 = vadd.f32 0.0, %v197
    %v199 = vpop.f32.mrb[0].mxu0
    %v200 = vpop.f32.mrb[0].mxu0
    %v201 = vadd.f32 0.0, %v200
    %v202 = vpop.f32.mrb[0].mxu0
    %203 = vdwg.mxu0
    %204 = vst.msk [vmem:[#allocation2] sm:$0xff] %vm35, %v198
    %205 = vst.msk [vmem:[#allocation2 + $0x8] sm:$0xff] %vm35, %v201
    // Predicated region
    $region14: #{tpu_custom_call.1} parent=1 // pred_check
      _
    $region15: #{tpu_custom_call.1} parent=1 // pred_check_branch
      %207 = sbr.rel (0) target = $region17
    $region16: #{tpu_custom_call.1} parent=1 // pred_region
      %s209 = ssub.s32 256, 256
      %210 = vsyncadd [#allocation3], %s209
      %s211 = sshll.u32 [#allocation2], 4
      %s212 = int_to_ptr.vmem [resolvable:$true] %s211
      %217 = dma.vmem_to_hbm [thread:$0]  %s212, 256, %s3, [#allocation3], 128, 128, 8
    $region17: #{tpu_custom_call.1} parent=1 // pred_fallthru
      _
    // Predicated region
    $region18: #{tpu_custom_call.1} parent=1 // pred_check
      _
    $region19: #{tpu_custom_call.1} parent=1 // pred_check_branch
      %219 = sbr.rel (0) target = $region21
    $region20: #{tpu_custom_call.1} parent=1 // pred_region
      %220 = dma.done [#allocation3], 256
    $region21: #{tpu_custom_call.1} parent=1 // pred_fallthru
      _
    %221 = vsyncpa [#allocation3], 1

</llo_original>
